<compile_context>
chip_gen: v5e
topology: v5e:2x2
jax: 0.10.0
libtpu: 0.0.40
codegen_flags: <defaults>
</compile_context>

<pallas_src>
import jax
import jax.numpy as jnp
from jax import lax
from jax.experimental import pallas as pl
from jax.experimental.pallas import tpu as pltpu


def _cdiv(a, b):
    return -(-a // b)


def _round_up(n, m):
    return _cdiv(n, m) * m


def _pick_tile_b(batch, tile_b):
    """Largest divisor of `batch` <= tile_b (no padded batch rows), preferring
    >= 2 blocks on the parallel grid axis so v7x's 2nd TensorCore gets work."""
    upper = min(tile_b, batch)
    if batch >= 2:
        upper = min(upper, max(1, batch // 2))
    for d in range(upper, 0, -1):
        if batch % d == 0:
            return d
    return 1


def _make_channel_attention_kernel(*, tile_hw, chunk, n_chunks, rem, inv_hw,
                                   needs_mask, neg_slope, max_dtype):
    """Builds the kernel with all static shape/tiling info baked in."""

    def _accumulate(x, sum_acc, max_acc, masked):
        # Steady state stays on the VPU: 128-lane chunk adds/maxes into
        # lane-partial accumulators. One accumulator load/store per step.
        s = sum_acc[...]
        m = max_acc[...]
        for i in range(n_chunks):
            lo = i * chunk
            if masked and lo >= rem:
                break  # chunk is entirely padding -> statically elided
            c = x[:, :, lo:lo + chunk]
            if masked and lo + chunk > rem:
                lane = lax.broadcasted_iota(jnp.int32, c.shape, dimension=2)
                valid = (lo + lane) < rem
                c_sum = jnp.where(valid, c, jnp.zeros_like(c))
                c_max = jnp.where(valid, c, jnp.full_like(c, -jnp.inf))
            else:
                c_sum = c
                c_max = c
            s = s + c_sum.astype(jnp.float32)
            m = jnp.maximum(m, c_max.astype(max_dtype))
        sum_acc[...] = s
        max_acc[...] = m

    def kernel(x_ref, w1t_ref, w2t_ref, o_ref, sum_acc, max_acc):
        k = pl.program_id(1)
        last = pl.num_programs(1) - 1

        @pl.when(k == 0)
        def _():
            sum_acc[...] = jnp.zeros_like(sum_acc)
            max_acc[...] = jnp.full_like(max_acc, -jnp.inf)

        x = x_ref[...]  # (t_b, C, tile_hw) in the input dtype (no bulk cast)

        if needs_mask:
            # Masking only on the final (partial) HW tile; full tiles run the
            # unmasked accumulate.
            @pl.when(k != last)
            def _():
                _accumulate(x, sum_acc, max_acc, masked=False)

            @pl.when(k == last)
            def _():
                _accumulate(x, sum_acc, max_acc, masked=True)
        else:
            _accumulate(x, sum_acc, max_acc, masked=False)

        @pl.when(k == last)
        def _():
            # Single cross-lane (XLU) reduce per batch block.
            avg = jnp.sum(sum_acc[...], axis=-1) * inv_hw            # (t_b, C)
            mx = jnp.max(max_acc[...], axis=-1).astype(jnp.float32)  # (t_b, C)

            w1t = w1t_ref[...].astype(jnp.float32)   # (C, hidden)
            w2t = w2t_ref[...].astype(jnp.float32)   # (hidden, C)

            def branch(v):
                h = jnp.dot(v, w1t, preferred_element_type=jnp.float32)
                h = jnp.where(h >= 0, h, neg_slope * h)   # LeakyReLU
                return jnp.dot(h, w2t, preferred_element_type=jnp.float32)

            out = branch(avg) + branch(mx)   # two small dots -> no concat
            o_ref[...] = jax.nn.sigmoid(out)[:, None, :].astype(o_ref.dtype)

    return kernel


def channel_attention(x, w1, w2, *, negative_slope=0.01, tile_b=8,
                      max_tile_hw=2048):
    """x: (B, C, H, W); w1: (C*ratio, C); w2: (C, C*ratio).

    Returns sigmoid attention weights of shape (B, C, 1, 1)."""
    B, C, H, W = x.shape
    HW = H * W
    hidden, c_in = w1.shape
    assert c_in == C and w2.shape == (C, hidden)
    assert jnp.issubdtype(x.dtype, jnp.floating)

    x_flat = x.reshape(B, C, HW)
    # Pre-transpose weights host-side: no in-kernel XLU transposes.
    w1t = jnp.transpose(w1)  # (C, hidden)
    w2t = jnp.transpose(w2)  # (hidden, C)

    itemsize = jnp.dtype(x.dtype).itemsize
    w_itemsize = jnp.dtype(w1.dtype).itemsize

    # ---- generation-aware VMEM budgeting ------------------------------------
    try:
        phys_vmem = int(pltpu.get_tpu_info().vmem_capacity_bytes)
    except Exception:
        phys_vmem = 64 << 20  # conservative fallback (v7x per-core VMEM)
    budget = min(int(phys_vmem * 0.6), 80 << 20)

    t_b = _pick_tile_b(B, tile_b)

    c_sub = _round_up(C, 8)
    c_lane = _round_up(C, 128)
    hid_sub = _round_up(hidden, 8)
    hid_lane = _round_up(hidden, 128)

    # Fixed (non-streamed) VMEM: double-buffered weights, accumulators, output.
    weight_bytes = 2 * (c_sub * hid_lane + hid_sub * c_lane) * w_itemsize
    scratch_bytes = 2 * t_b * c_sub * 128 * 4
    out_bytes = 2 * t_b * 8 * c_lane * itemsize
    fixed_bytes = weight_bytes + scratch_bytes + out_bytes + (2 << 20)

    # Streamed x tile: fill the remaining budget (double-buffered), capped
    # where the measured tile sweep shows diminishing returns (~1-2k lanes).
    per_lane = 2 * t_b * c_sub * itemsize
    stream_budget = max(budget - fixed_bytes, per_lane * 128)
    cap = int(max(128, min(stream_budget // per_lane, max_tile_hw)))

    if HW <= 128:
        t_hw = HW
    else:
        # Balanced tiles: equal-ish multiples of 128 so the last tile is not
        # mostly padding; never larger than HW.
        n_tiles = _cdiv(HW, cap)
        t_hw = 128 * _cdiv(_cdiv(HW, n_tiles), 128)
        while t_hw > HW:
            n_tiles += 1
            t_hw = 128 * _cdiv(_cdiv(HW, n_tiles), 128)

    grid_b = B // t_b                 # t_b divides B -> no padded batch rows
    grid_hw = _cdiv(HW, t_hw)
    needs_mask = (HW % t_hw) != 0
    rem = HW - (grid_hw - 1) * t_hw   # valid lanes in the last HW tile (static)

    if t_hw % 128 == 0:
        chunk, n_chunks, acc_lanes = 128, t_hw // 128, 128
    else:                             # only when HW < 128 (single small tile)
        chunk, n_chunks, acc_lanes = t_hw, 1, t_hw

    # Max is exact in the input dtype (halves vreg traffic for bf16 inputs).
    max_dtype = x.dtype if jnp.issubdtype(x.dtype, jnp.floating) else jnp.float32

    kernel = _make_channel_attention_kernel(
        tile_hw=t_hw, chunk=chunk, n_chunks=n_chunks, rem=rem,
        inv_hw=1.0 / float(HW), needs_mask=needs_mask,
        neg_slope=float(negative_slope), max_dtype=max_dtype)

    # VMEM limit: always set; cover the estimate with headroom and clamp below
    # the chip's physical VMEM (v7x: 64 MiB, v5e/v6e: 128 MiB).
    x_tile_bytes = 2 * t_b * c_sub * _round_up(t_hw, 128) * itemsize
    vmem_est = x_tile_bytes + fixed_bytes
    vmem_limit = int(min(max(int(vmem_est * 1.25) + (4 << 20), 32 << 20),
                         max(phys_vmem - (8 << 20), 32 << 20)))

    cost = pl.CostEstimate(
        flops=int(2 * B * C * HW + 8 * B * C * hidden),
        transcendentals=int(B * C),
        bytes_accessed=int(x_flat.size * itemsize
                           + 2 * C * hidden * w_itemsize
                           + B * C * itemsize),
    )

    out = pl.pallas_call(
        kernel,
        out_shape=jax.ShapeDtypeStruct((B, 1, C), x.dtype),
        grid=(grid_b, grid_hw),
        in_specs=[
            # Streamed input tiles.
            pl.BlockSpec((t_b, C, t_hw), lambda b, k: (b, 0, k)),
            # Weights: constant block index -> DMA'd once, resident in VMEM.
            pl.BlockSpec((C, hidden), lambda b, k: (0, 0)),
            pl.BlockSpec((hidden, C), lambda b, k: (0, 0)),
        ],
        out_specs=pl.BlockSpec((t_b, 1, C), lambda b, k: (b, 0, 0)),
        scratch_shapes=[
            pltpu.VMEM((t_b, C, acc_lanes), jnp.float32),  # lane-partial sum
            pltpu.VMEM((t_b, C, acc_lanes), max_dtype),    # lane-partial max
        ],
        compiler_params=pltpu.CompilerParams(
            dimension_semantics=("parallel", "arbitrary"),
            vmem_limit_bytes=vmem_limit,
        ),
        cost_estimate=cost,
    )(x_flat, w1t, w2t)

    return out.reshape(B, C, 1, 1)


def _reference(x, w1, w2, negative_slope=0.01):
    # Pure-JAX reference mirroring the PyTorch forward.
    avg = jnp.mean(x, axis=(2, 3))
    mx = jnp.max(x, axis=(2, 3))

    def branch(v):
        h = v @ w1.T
        h = jnp.where(h >= 0, h, negative_slope * h)
        return h @ w2.T

    return jax.nn.sigmoid(branch(avg) + branch(mx))[:, :, None, None]


if __name__ == "__main__":
    B, C, H, W = 2, 4, 16, 16
    ratio = 3
    hidden = C * ratio

    key = jax.random.PRNGKey(0)
    kx, k1, k2 = jax.random.split(key, 3)

    x = jax.random.normal(kx, (B, C, H, W), dtype=jnp.float32)
    # Conv2d 1x1, bias=False -> plain matrices.
    w1 = jax.random.normal(k1, (hidden, C), dtype=jnp.float32) * (1.0 / jnp.sqrt(C))
    w2 = jax.random.normal(k2, (C, hidden), dtype=jnp.float32) * (1.0 / jnp.sqrt(hidden))

    out = jax.block_until_ready(channel_attention(x, w1, w2))
    ref = _reference(x, w1, w2)
    assert out.shape == (B, C, 1, 1), out.shape
    assert jnp.allclose(out, ref, atol=1e-5, rtol=1e-5), "mismatch vs reference"

    # Multi-tile configuration with a masked last HW tile (HW=576 -> 256+256+64).
    x2 = jax.random.normal(kx, (2, 8, 24, 24), dtype=jnp.float32)
    w1b = jax.random.normal(k1, (24, 8), dtype=jnp.float32) * (1.0 / jnp.sqrt(8))
    w2b = jax.random.normal(k2, (8, 24), dtype=jnp.float32) * (1.0 / jnp.sqrt(24))
    out2 = jax.block_until_ready(channel_attention(x2, w1b, w2b, max_tile_hw=256))
    ref2 = _reference(x2, w1b, w2b)
    assert out2.shape == (2, 8, 1, 1), out2.shape
    assert jnp.allclose(out2, ref2, atol=1e-5, rtol=1e-5), "mismatch vs reference (gridded)"

    print("KERNEL_OK")
</pallas_src>

<mosaic_0001>
module attributes {stable_mosaic.version = 11 : i64} {
  func.func @kernel(%arg0: i32, %arg1: i32, %arg2: memref<1x4x256xf32, #tpu.memory_space<vmem>>, %arg3: memref<4x12xf32, #tpu.memory_space<vmem>>, %arg4: memref<12x4xf32, #tpu.memory_space<vmem>>, %arg5: memref<1x1x4xf32, #tpu.memory_space<vmem>>, %arg6: memref<1x4x128xf32, #tpu.memory_space<vmem>>, %arg7: memref<1x4x128xf32, #tpu.memory_space<vmem>>) attributes {dimension_semantics = [#tpu.dimension_semantics<parallel>, #tpu.dimension_semantics<arbitrary>], iteration_bounds = array<i64: 2, 1>, scalar_prefetch = 0 : i64, scratch_operands = 2 : i64, tpu.core_type = #tpu.core_type<tc>, window_params = [{transform_indices = @transform_0, window_bounds = array<i64: 1, 4, 256>}, {pipeline_mode = #tpu.pipeline_mode<synchronous>, transform_indices = @transform_1, window_bounds = array<i64: 4, 12>}, {pipeline_mode = #tpu.pipeline_mode<synchronous>, transform_indices = @transform_2, window_bounds = array<i64: 12, 4>}, {transform_indices = @transform_3, window_bounds = array<i64: 1, 1, 4>}]} {
    %c0_i32 = arith.constant 0 : i32
    %0 = arith.cmpi eq, %arg1, %c0_i32 : i32
    %1 = arith.extui %0 : i1 to i32
    %c0_i32_0 = arith.constant 0 : i32
    %2 = arith.cmpi ne, %1, %c0_i32_0 : i32
    scf.if %2 {
      %cst = arith.constant 0.000000e+00 : f32
      %17 = vector.broadcast %cst : f32 to vector<1x4x128xf32>
      %c0_17 = arith.constant 0 : index
      %c0_18 = arith.constant 0 : index
      %c0_19 = arith.constant 0 : index
      %18 = vector.load %arg6[%c0_17, %c0_18, %c0_19] : memref<1x4x128xf32, #tpu.memory_space<vmem>>, vector<1x4x128xf32>
      tpu.vector_store %arg6[%c0_17, %c0_18, %c0_19], %17 {strides = array<i32>} : memref<1x4x128xf32, #tpu.memory_space<vmem>>, vector<1x4x128xf32>,
      %cst_20 = arith.constant 0xFF800000 : f32
      %19 = vector.broadcast %cst_20 : f32 to vector<1x4x128xf32>
      %c0_21 = arith.constant 0 : index
      %c0_22 = arith.constant 0 : index
      %c0_23 = arith.constant 0 : index
      %20 = vector.load %arg7[%c0_21, %c0_22, %c0_23] : memref<1x4x128xf32, #tpu.memory_space<vmem>>, vector<1x4x128xf32>
      tpu.vector_store %arg7[%c0_21, %c0_22, %c0_23], %19 {strides = array<i32>} : memref<1x4x128xf32, #tpu.memory_space<vmem>>, vector<1x4x128xf32>,
    } else {
    }
    %c0 = arith.constant 0 : index
    %c0_1 = arith.constant 0 : index
    %c0_2 = arith.constant 0 : index
    %3 = vector.load %arg2[%c0, %c0_1, %c0_2] : memref<1x4x256xf32, #tpu.memory_space<vmem>>, vector<1x4x256xf32>
    %c0_3 = arith.constant 0 : index
    %c0_4 = arith.constant 0 : index
    %c0_5 = arith.constant 0 : index
    %4 = vector.load %arg6[%c0_3, %c0_4, %c0_5] : memref<1x4x128xf32, #tpu.memory_space<vmem>>, vector<1x4x128xf32>
    %c0_6 = arith.constant 0 : index
    %c0_7 = arith.constant 0 : index
    %c0_8 = arith.constant 0 : index
    %5 = vector.load %arg7[%c0_6, %c0_7, %c0_8] : memref<1x4x128xf32, #tpu.memory_space<vmem>>, vector<1x4x128xf32>
    %6 = vector.extract_strided_slice %3 {offsets = [0, 0, 0], sizes = [1, 4, 128], strides = [1, 1, 1]} : vector<1x4x256xf32> to vector<1x4x128xf32>
    %7 = arith.addf %4, %6 : vector<1x4x128xf32>
    %8 = arith.maximumf %5, %6 : vector<1x4x128xf32>
    %9 = vector.extract_strided_slice %3 {offsets = [0, 0, 128], sizes = [1, 4, 128], strides = [1, 1, 1]} : vector<1x4x256xf32> to vector<1x4x128xf32>
    %10 = arith.addf %7, %9 : vector<1x4x128xf32>
    %11 = arith.maximumf %8, %9 : vector<1x4x128xf32>
    %c0_9 = arith.constant 0 : index
    %c0_10 = arith.constant 0 : index
    %c0_11 = arith.constant 0 : index
    %12 = vector.load %arg6[%c0_9, %c0_10, %c0_11] : memref<1x4x128xf32, #tpu.memory_space<vmem>>, vector<1x4x128xf32>
    tpu.vector_store %arg6[%c0_9, %c0_10, %c0_11], %10 {strides = array<i32>} : memref<1x4x128xf32, #tpu.memory_space<vmem>>, vector<1x4x128xf32>,
    %c0_12 = arith.constant 0 : index
    %c0_13 = arith.constant 0 : index
    %c0_14 = arith.constant 0 : index
    %13 = vector.load %arg7[%c0_12, %c0_13, %c0_14] : memref<1x4x128xf32, #tpu.memory_space<vmem>>, vector<1x4x128xf32>
    tpu.vector_store %arg7[%c0_12, %c0_13, %c0_14], %11 {strides = array<i32>} : memref<1x4x128xf32, #tpu.memory_space<vmem>>, vector<1x4x128xf32>,
    %c0_i32_15 = arith.constant 0 : i32
    %14 = arith.cmpi eq, %arg1, %c0_i32_15 : i32
    %15 = arith.extui %14 : i1 to i32
    %c0_i32_16 = arith.constant 0 : i32
    %16 = arith.cmpi ne, %15, %c0_i32_16 : i32
    scf.if %16 {
      %c0_17 = arith.constant 0 : index
      %c0_18 = arith.constant 0 : index
      %c0_19 = arith.constant 0 : index
      %17 = vector.load %arg6[%c0_17, %c0_18, %c0_19] : memref<1x4x128xf32, #tpu.memory_space<vmem>>, vector<1x4x128xf32>
      %cst = arith.constant dense<0.000000e+00> : vector<1x4xf32>
      %18 = vector.multi_reduction <add>, %17, %cst [2] : vector<1x4x128xf32> to vector<1x4xf32>
      %cst_20 = arith.constant 3.906250e-03 : f32
      %19 = vector.broadcast %cst_20 : f32 to vector<1x4xf32>
      %20 = arith.mulf %18, %19 : vector<1x4xf32>
      %c0_21 = arith.constant 0 : index
      %c0_22 = arith.constant 0 : index
      %c0_23 = arith.constant 0 : index
      %21 = vector.load %arg7[%c0_21, %c0_22, %c0_23] : memref<1x4x128xf32, #tpu.memory_space<vmem>>, vector<1x4x128xf32>
      %cst_24 = arith.constant dense<0xFF800000> : vector<1x4xf32>
      %22 = vector.multi_reduction <maximumf>, %21, %cst_24 [2] : vector<1x4x128xf32> to vector<1x4xf32>
      %c0_25 = arith.constant 0 : index
      %c0_26 = arith.constant 0 : index
      %23 = vector.load %arg3[%c0_25, %c0_26] : memref<4x12xf32, #tpu.memory_space<vmem>>, vector<4x12xf32>
      %c0_27 = arith.constant 0 : index
      %c0_28 = arith.constant 0 : index
      %24 = vector.load %arg4[%c0_27, %c0_28] : memref<12x4xf32, #tpu.memory_space<vmem>>, vector<12x4xf32>
      %cst_29 = arith.constant dense<0.000000e+00> : vector<1x12xf32>
      %25 = tpu.matmul %20, %23, %cst_29 {dimension_numbers = #tpu.dot_dimension_numbers<[1], [0], [0], [1], [0, 0, 1, 1], [], []>} : vector<1x4xf32>, vector<4x12xf32>, vector<1x12xf32> -> vector<1x12xf32>
      %cst_30 = arith.constant 0.000000e+00 : f32
      %26 = vector.broadcast %cst_30 : f32 to vector<1x12xf32>
      %27 = arith.cmpf oge, %25, %26 : vector<1x12xf32>
      %cst_31 = arith.constant 0.00999999977 : f32
      %28 = vector.broadcast %cst_31 : f32 to vector<1x12xf32>
      %29 = arith.mulf %28, %25 : vector<1x12xf32>
      %30 = arith.select %27, %25, %29 : vector<1x12xi1>, vector<1x12xf32>
      %cst_32 = arith.constant dense<0.000000e+00> : vector<1x4xf32>
      %31 = tpu.matmul %30, %24, %cst_32 {dimension_numbers = #tpu.dot_dimension_numbers<[1], [0], [0], [1], [0, 0, 1, 1], [], []>} : vector<1x12xf32>, vector<12x4xf32>, vector<1x4xf32> -> vector<1x4xf32>
      %cst_33 = arith.constant dense<0.000000e+00> : vector<1x12xf32>
      %32 = tpu.matmul %22, %23, %cst_33 {dimension_numbers = #tpu.dot_dimension_numbers<[1], [0], [0], [1], [0, 0, 1, 1], [], []>} : vector<1x4xf32>, vector<4x12xf32>, vector<1x12xf32> -> vector<1x12xf32>
      %cst_34 = arith.constant 0.000000e+00 : f32
      %33 = vector.broadcast %cst_34 : f32 to vector<1x12xf32>
      %34 = arith.cmpf oge, %32, %33 : vector<1x12xf32>
      %cst_35 = arith.constant 0.00999999977 : f32
      %35 = vector.broadcast %cst_35 : f32 to vector<1x12xf32>
      %36 = arith.mulf %35, %32 : vector<1x12xf32>
      %37 = arith.select %34, %32, %36 : vector<1x12xi1>, vector<1x12xf32>
      %cst_36 = arith.constant dense<0.000000e+00> : vector<1x4xf32>
      %38 = tpu.matmul %37, %24, %cst_36 {dimension_numbers = #tpu.dot_dimension_numbers<[1], [0], [0], [1], [0, 0, 1, 1], [], []>} : vector<1x12xf32>, vector<12x4xf32>, vector<1x4xf32> -> vector<1x4xf32>
      %39 = arith.addf %31, %38 : vector<1x4xf32>
      %40 = arith.negf %39 : vector<1x4xf32>
      %41 = math.exp %40 : vector<1x4xf32>
      %cst_37 = arith.constant 1.000000e+00 : f32
      %42 = vector.broadcast %cst_37 : f32 to vector<1x4xf32>
      %43 = arith.addf %42, %41 : vector<1x4xf32>
      %44 = arith.divf %42, %43 : vector<1x4xf32>
      %45 = vector.shape_cast %44 : vector<1x4xf32> to vector<1x1x4xf32>
      %c0_38 = arith.constant 0 : index
      %c0_39 = arith.constant 0 : index
      %c0_40 = arith.constant 0 : index
      %46 = vector.load %arg5[%c0_38, %c0_39, %c0_40] : memref<1x1x4xf32, #tpu.memory_space<vmem>>, vector<1x1x4xf32>
      tpu.vector_store %arg5[%c0_38, %c0_39, %c0_40], %45 {strides = array<i32>} : memref<1x1x4xf32, #tpu.memory_space<vmem>>, vector<1x1x4xf32>,
    } else {
    }
    return
  }
  func.func @transform_0(%arg0: i32, %arg1: i32) -> (i32, i32, i32) {
    %c0_i32 = arith.constant 0 : i32
    %c0_i32_0 = arith.constant 0 : i32
    return %arg0, %c0_i32, %arg1 : i32, i32, i32
  }
  func.func @transform_1(%arg0: i32, %arg1: i32) -> (i32, i32) {
    %c0_i32 = arith.constant 0 : i32
    %c0_i32_0 = arith.constant 0 : i32
    %c0_i32_1 = arith.constant 0 : i32
    return %c0_i32, %c0_i32_0 : i32, i32
  }
  func.func @transform_2(%arg0: i32, %arg1: i32) -> (i32, i32) {
    %c0_i32 = arith.constant 0 : i32
    %c0_i32_0 = arith.constant 0 : i32
    %c0_i32_1 = arith.constant 0 : i32
    return %c0_i32, %c0_i32_0 : i32, i32
  }
  func.func @transform_3(%arg0: i32, %arg1: i32) -> (i32, i32, i32) {
    %c0_i32 = arith.constant 0 : i32
    %c0_i32_0 = arith.constant 0 : i32
    %c0_i32_1 = arith.constant 0 : i32
    return %arg0, %c0_i32, %c0_i32_0 : i32, i32, i32
  }
}

</mosaic_0001>

<llo_original>
// kernel: tpu_custom_call.1
$region0: #{tpu_custom_call.1}
  #allocation0 [shape = 'u32[]', space=smem, size = 0x4, offset = 0x4, fixed_abs, tag = 'smem constant byte address 0x4 - core index']
  #allocation1 [shape = 'u32[72,128]{1,0:T(1,128)}', space=vmem, size = 0x9000, scoped, tag = 'internal scratch']
  #allocation2 [shape = 'f32[1,4,128]{2,1,0:T(4,128)}', space=vmem, size = 0x800, scoped, tag = 'scratch operand']
  #allocation3 [shape = 'f32[1,4,128]{2,1,0:T(4,128)}', space=vmem, size = 0x800, scoped, tag = 'scratch operand']
  %s0 = inlined_call_operand.vmem [shape: f32[2,4,256], index: 0, kind: input, shape index: {}]
  %s1 = inlined_call_operand.vmem [shape: f32[4,12], index: 1, kind: input, shape index: {}]
  %s2 = inlined_call_operand.vmem [shape: f32[12,4], index: 2, kind: input, shape index: {}]
  %s3 = inlined_call_operand.hbm [shape: f32[2,1,4], index: 3, kind: output, shape index: {}]
  %s4 = sld [smem:[#allocation0]]
  $region53: #{tpu_custom_call.1} parent=0
    _
  %s6 = ssub.s32 1, %s4
  %s7 = scalar_select 0, %s6, %s4
  $region1: #{tpu_custom_call.1} parent=0
    #allocation4 [shape = 'u8[1024]{0}', space=vmem, size = 0x400, scoped, tag = 'output window, operand 0']
    #allocation5 [shape = 's32[2]{0}', space=sflag, size = 0x8, scoped, tag = 'scoped memory for tpu_custom_call.1']
    %8 = vsyncpa [#allocation5], 0
    %s9 = scalar_lea.sflag [#allocation5], 1
    %10 = vsyncpa %s9, 0
    loop: start=0, step=1, limit=4
    $region2: #{tpu_custom_call.1} parent=1 // loop_pre_header
      _
    $region3: #{tpu_custom_call.1} parent=1 // loop_header
      %s12 = sphi 0, %s16
      %p13 = scmp.ge.s32.totalorder %s12, 4
      %s19 = sphi 0, %s31
      %s20 = sphi 0, %s27
      %s21 = sphi 0, %s19
      %s22 = sphi 0, %s20
      %s23 = sphi 0, %s21
      %s24 = sphi 0, %s22
      %s36 = sphi 0, %s38
      %s39 = sphi 0, %s36
      %s40 = sphi 0, %s39
      %s56 = sphi 0, %s40
      %s60 = sphi 0, %s60
      %s62 = sphi 0, %s60
      %s63 = sphi 0, %s62
      %s77 = sphi 0, %s63
      %s81 = sphi 0, %s81
      %s83 = sphi 0, %s81
      %s84 = sphi 0, %s83
      %s98 = sphi 0, %s84
      %s104 = sphi 0, %s106
      %s107 = sphi 0, %s104
      %s108 = sphi 0, %s107
      %s124 = sphi 0, %s108
    $region4: #{tpu_custom_call.1} parent=1 // loop_header_branch
      %15 = sbr.rel (%p13) target = $region8
    $region5: #{tpu_custom_call.1} parent=1 // loop_body
      %s17 = ssub.s32 %s12, 1
      %s18 = ssub.s32 %s12, 2
      %s25 = sadd.s32 1, %s20
      %p26 = scmp.ge.s32.totalorder %s25, 1
      %s27 = scalar_select %p26, 0, %s25
      %s28 = sadd.s32 1, %s19
      %s29 = scalar_select %p26, %s28, %s19
      %p30 = scmp.ge.s32.totalorder %s29, 2
      %s31 = scalar_select %p30, 0, %s29
      %s32 = ssub.s32 %s19, %s31
      %s33 = ssub.s32 %s20, %s27
      %s34 = sor.u32 %s32, %s33
      %p35 = scmp.eq.s32.totalorder %s34, 0
      %s37 = sadd.s32 %s36, 1
      %s38 = scalar_select %p35, %s36, %s37
      %p41 = pneg %p35
      %p42 = scmp.eq.s32.totalorder %s12, 1
      %p43 = por %p41, %p42
      %p44 = scmp.ne.s32.totalorder %s36, %s39
      %p45 = scmp.eq.s32.totalorder %s12, 0
      %p46 = por %p44, %p45
      %p47 = scmp.ne.s32.totalorder %s36, %s39
      %p48 = scmp.eq.s32.totalorder %s17, 1
      %p49 = por %p47, %p48
      %p50 = scmp.ne.s32.totalorder %s39, %s40
      %p51 = scmp.eq.s32.totalorder %s17, 0
      %p52 = por %p50, %p51
      %p53 = scmp.ne.s32.totalorder %s39, %s40
      %p54 = scmp.eq.s32.totalorder %s18, 1
      %p55 = por %p53, %p54
      %p57 = scmp.ne.s32.totalorder %s40, %s56
      %p58 = scmp.eq.s32.totalorder %s18, 0
      %p59 = por %p57, %p58
      %s61 = sadd.s32 %s60, 1
      %p64 = scmp.eq.s32.totalorder %s12, 1
      %p65 = scmp.ne.s32.totalorder %s60, %s62
      %p66 = scmp.eq.s32.totalorder %s12, 0
      %p67 = por %p65, %p66
      %p68 = scmp.ne.s32.totalorder %s60, %s62
      %p69 = scmp.eq.s32.totalorder %s17, 1
      %p70 = por %p68, %p69
      %p71 = scmp.ne.s32.totalorder %s62, %s63
      %p72 = scmp.eq.s32.totalorder %s17, 0
      %p73 = por %p71, %p72
      %p74 = scmp.ne.s32.totalorder %s62, %s63
      %p75 = scmp.eq.s32.totalorder %s18, 1
      %p76 = por %p74, %p75
      %p78 = scmp.ne.s32.totalorder %s63, %s77
      %p79 = scmp.eq.s32.totalorder %s18, 0
      %p80 = por %p78, %p79
      %s82 = sadd.s32 %s81, 1
      %p85 = scmp.eq.s32.totalorder %s12, 1
      %p86 = scmp.ne.s32.totalorder %s81, %s83
      %p87 = scmp.eq.s32.totalorder %s12, 0
      %p88 = por %p86, %p87
      %p89 = scmp.ne.s32.totalorder %s81, %s83
      %p90 = scmp.eq.s32.totalorder %s17, 1
      %p91 = por %p89, %p90
      %p92 = scmp.ne.s32.totalorder %s83, %s84
      %p93 = scmp.eq.s32.totalorder %s17, 0
      %p94 = por %p92, %p93
      %p95 = scmp.ne.s32.totalorder %s83, %s84
      %p96 = scmp.eq.s32.totalorder %s18, 1
      %p97 = por %p95, %p96
      %p99 = scmp.ne.s32.totalorder %s84, %s98
      %p100 = scmp.eq.s32.totalorder %s18, 0
      %p101 = por %p99, %p100
      %s102 = ssub.s32 %s19, %s31
      %p103 = scmp.eq.s32.totalorder %s102, 0
      %s105 = sadd.s32 %s104, 1
      %s106 = scalar_select %p103, %s104, %s105
      %p109 = pneg %p103
      %p110 = scmp.eq.s32.totalorder %s12, 1
      %p111 = por %p109, %p110
      %p112 = scmp.ne.s32.totalorder %s104, %s107
      %p113 = scmp.eq.s32.totalorder %s12, 0
      %p114 = por %p112, %p113
      %p115 = scmp.ne.s32.totalorder %s104, %s107
      %p116 = scmp.eq.s32.totalorder %s17, 1
      %p117 = por %p115, %p116
      %p118 = scmp.ne.s32.totalorder %s107, %s108
      %p119 = scmp.eq.s32.totalorder %s17, 0
      %p120 = por %p118, %p119
      %p121 = scmp.ne.s32.totalorder %s107, %s108
      %p122 = scmp.eq.s32.totalorder %s18, 1
      %p123 = por %p121, %p122
      %p125 = scmp.ne.s32.totalorder %s108, %s124
      %p126 = scmp.eq.s32.totalorder %s18, 0
      %p127 = por %p125, %p126
      %p128 = scmp.le.s32.totalorder 1, %s12
      %p129 = scmp.lt.s32.totalorder %s12, 3
      %p130 = pnand %p128, %p129
      %p131 = pneg %p130
      // Predicated region
      $region9: #{tpu_custom_call.1} parent=5 // pred_check
        _
      $region10: #{tpu_custom_call.1} parent=5 // pred_check_branch
        %133 = sbr.rel (%p130) target = $region12
      $region11: #{tpu_custom_call.1} parent=5 // pred_region
        %s134 = ssub.s32 %s12, 1
        // Predicated region
        $region13: #{tpu_custom_call.1} parent=11 // pred_check
          %p135 = pneg %p73
        $region14: #{tpu_custom_call.1} parent=11 // pred_check_branch
          %137 = sbr.rel (%p135) target = $region16
        $region15: #{tpu_custom_call.1} parent=11 // pred_region
          _
        $region16: #{tpu_custom_call.1} parent=11 // pred_fallthru
          _
        // Predicated region
        $region17: #{tpu_custom_call.1} parent=11 // pred_check
          %p138 = pneg %p94
        $region18: #{tpu_custom_call.1} parent=11 // pred_check_branch
          %140 = sbr.rel (%p138) target = $region20
        $region19: #{tpu_custom_call.1} parent=11 // pred_region
          _
        $region20: #{tpu_custom_call.1} parent=11 // pred_fallthru
          _
      $region12: #{tpu_custom_call.1} parent=5 // pred_fallthru
        _
      %p141 = scmp.lt.s32.totalorder %s12, 2
      // Predicated region
      $region21: #{tpu_custom_call.1} parent=5 // pred_check
        %p142 = pneg %p141
      $region22: #{tpu_custom_call.1} parent=5 // pred_check_branch
        %144 = sbr.rel (%p142) target = $region24
      $region23: #{tpu_custom_call.1} parent=5 // pred_region
        // Predicated region
        $region25: #{tpu_custom_call.1} parent=23 // pred_check
          %p145 = pneg %p46
        $region26: #{tpu_custom_call.1} parent=23 // pred_check_branch
          %147 = sbr.rel (%p145) target = $region28
        $region27: #{tpu_custom_call.1} parent=23 // pred_region
          %s148 = smul.u32 2, %s20
          %p149 = scmp.lt.s32.totalorder %s19, 1
          %s150 = scalar_select %p149, %s19, 1
          %p151 = scmp.lt.s32.totalorder %s148, 1
          %s152 = scalar_select %p151, %s148, 1
          %s153 = smul.addr %s150, 2
          %s154 = sadd.s32 %s152, %s153
          %s155 = smul.addr %s154, 4
          %s156 = scalar_lea.vmem %s0, %s155
          %s157 = smul.u32 2, %s20
        $region28: #{tpu_custom_call.1} parent=23 // pred_fallthru
          _
      $region24: #{tpu_custom_call.1} parent=5 // pred_fallthru
        _
      %p158 = scmp.le.s32.totalorder 1, %s12
      %p159 = scmp.lt.s32.totalorder %s12, 3
      %p160 = pnand %p158, %p159
      %p161 = pneg %p160
      // Predicated region
      $region29: #{tpu_custom_call.1} parent=5 // pred_check
        _
      $region30: #{tpu_custom_call.1} parent=5 // pred_check_branch
        %163 = sbr.rel (%p160) target = $region32
      $region31: #{tpu_custom_call.1} parent=5 // pred_region
        %s164 = ssub.s32 %s12, 1
        %s165 = smul.u32 2, %s22
        %p166 = scmp.lt.s32.totalorder %s21, 1
        %s167 = scalar_select %p166, %s21, 1
        %p168 = scmp.lt.s32.totalorder %s165, 1
        %s169 = scalar_select %p168, %s165, 1
        %s170 = smul.addr %s167, 2
        %s171 = sadd.s32 %s169, %s170
        %s172 = smul.addr %s171, 4
        %s173 = scalar_lea.vmem %s0, %s172
        %p174 = pneg %p52
        %p175 = pneg %p49
        %p176 = pneg %p73
        %p177 = pneg %p70
        %p178 = pneg %p94
        %p179 = pneg %p91
        %p180 = pneg %p120
        %p181 = pneg %p117
        %s182 = sand.u32 %s107, 1
        %s183 = scalar_lea.sflag [#allocation5], %s182
        %s184 = sand.u32 %s107, 1
        %s185 = scalar_lea.vmem [#allocation4], %s184
        %s186 = smul.u32 2, %s22
        %p187 = scmp.lt.s32.totalorder %s21, 1
        %s188 = scalar_select %p187, %s21, 1
        %p189 = scmp.lt.s32.totalorder %s186, 1
        %s190 = scalar_select %p189, %s186, 1
        %s191 = smul.addr %s188, 2
        %s192 = sadd.s32 %s190, %s191
        %s193 = smul.addr %s192, 4
        %s194 = scalar_lea.vmem %s0, %s193
        %s195 = smul.u32 2, %s22
        %p196 = scmp.eq.s32.totalorder %s22, 0
        // Predicated region
        $region33: #{tpu_custom_call.1} parent=31 // pred_check
          %p197 = pneg %p196
        $region34: #{tpu_custom_call.1} parent=31 // pred_check_branch
          %199 = sbr.rel (%p197) target = $region36
        $region35: #{tpu_custom_call.1} parent=31 // pred_region
          %200 = vst [vmem:[#allocation2] sm:$0xf] 0.0
          %201 = vst [vmem:[#allocation3] sm:$0xf] -inf
        $region36: #{tpu_custom_call.1} parent=31 // pred_fallthru
          _
        %v202 = vld [vmem:[%s194] sm:$0xff]
        %v203 = vld [vmem:[#allocation2] sm:$0xf]
        %v204 = vld [vmem:[#allocation3] sm:$0xf]
        %v205 = vadd.f32 %v203, %v202
        %v206 = vmax.f32 %v204, %v202
        %208 = vst [vmem:[#allocation1] ss:$2 sm:$0xff] %v202
        %v209 = vld.sshfl [vmem:[#allocation1 + $0x8] sm:$0xff pattern:$0x75316420]
        %v211 = vadd.f32 %v205, %v209
        %212 = vst [vmem:[#allocation1] ss:$2 sm:$0xff] %v202
        %v213 = vld.sshfl [vmem:[#allocation1 + $0x8] sm:$0xff pattern:$0x75316420]
        %v215 = vmax.f32 %v206, %v213
        %216 = vst [vmem:[#allocation2] sm:$0xf] %v211
        %217 = vst [vmem:[#allocation3] sm:$0xf] %v215
        // Predicated region
        $region37: #{tpu_custom_call.1} parent=31 // pred_check
          %p218 = pneg %p196
        $region38: #{tpu_custom_call.1} parent=31 // pred_check_branch
          %220 = sbr.rel (%p218) target = $region40
        $region39: #{tpu_custom_call.1} parent=31 // pred_region
          %v221 = vld [vmem:[#allocation2] sm:$0xf]
          %vm222 = vcmask 1043456
          %v223 = vsel %vm222, %v221, 0.0
          %224 = vadd.xlane.f32.xlu0 %v223
          %v225 = vpop.xlane.xlu0 %224
          %v226 = vmul.f32 %v225, 0.00390625
          %v227 = vld [vmem:[#allocation3] sm:$0xf]
          %v228 = vsel %vm222, %v227, -inf
          %229 = vmax.xlane.f32.xlu0 %v228
          %v230 = vpop.xlane.xlu0 %229
          %v231 = vld [vmem:[%s1] sm:$0xf]
          %v232 = vld [vmem:[%s2] sm:$0xff]
          %v233 = vld [vmem:[%s2 + $0x8] sm:$0xf]
          %v235 = vlaneseq
          %v236 = vand.u32 %v235, 127
          %v237 = vperm.slane %v226, %v236
          %vm238 = vcmask 31744
          %v239 = vsel %vm238, %v237, 0
          %v242 = vsel %vm222, %v231, 0
          %244 = vmatpush.msra.mxu0 0.0
          %245 = vmatpush.msra.mxu0 0.0
          %246 = vmatpush.msra.mxu0 0.0
          %247 = vmatpush.msra.mxu0 0.0
          %248 = vmatpush.msra.mxu0 0.0
          %249 = vmatpush.msra.mxu0 0.0
          %250 = vmatpush.msra.mxu0 0.0
          %251 = vmatpush.msra.mxu0 0.0
          %252 = vmatpush.msra.mxu0 0.0
          %253 = vmatpush.msra.mxu0 0.0
          %254 = vmatpush.msra.mxu0 0.0
          %255 = vmatpush.msra.mxu0 0.0
          %256 = vmatpush.msra.mxu0 0.0
          %257 = vmatpush.msra.mxu0 0.0
          %258 = vmatpush.msra.mxu0 0.0
          %259 = vmatpush.msra.mxu0 %v242
          %260 = vmatmul.f32.gmra.mxu0 %v239
          %v261 = vpop.f32.mrf.mxu0
          %v262 = vadd.f32 0.0, %v261
          %263 = vdwg.mxu0
          %vm264 = vcmp.ge.f32.partialorder %v262, 0.0
          %v265 = vmul.f32 %v262, 0.01
          %v266 = vsel %vm264, %v262, %v265
          %v268 = vperm.slane %v230, %v236
          %v269 = vsel %vm238, %v268, 0
          %271 = vmatpush.msra.mxu0 0.0
          %272 = vmatpush.msra.mxu0 0.0
          %273 = vmatpush.msra.mxu0 0.0
          %274 = vmatpush.msra.mxu0 0.0
          %275 = vmatpush.msra.mxu0 0.0
          %276 = vmatpush.msra.mxu0 0.0
          %277 = vmatpush.msra.mxu0 0.0
          %278 = vmatpush.msra.mxu0 0.0
          %279 = vmatpush.msra.mxu0 0.0
          %280 = vmatpush.msra.mxu0 0.0
          %281 = vmatpush.msra.mxu0 0.0
          %282 = vmatpush.msra.mxu0 0.0
          %283 = vmatpush.msra.mxu0 0.0
          %284 = vmatpush.msra.mxu0 0.0
          %285 = vmatpush.msra.mxu0 0.0
          %286 = vmatpush.msra.mxu0 %v242
          %287 = vmatmul.f32.gmra.mxu0 %v269
          %v288 = vpop.f32.mrf.mxu0
          %v289 = vadd.f32 0.0, %v288
          %290 = vdwg.mxu0
          %vm291 = vcmp.ge.f32.partialorder %v289, 0.0
          %v292 = vmul.f32 %v289, 0.01
          %v293 = vsel %vm291, %v289, %v292
          %vm294 = vcmask 97280
          %v296 = vsel %vm294, %v293, 0
          %v299 = vsel %vm222, %v233, 0
          %301 = vmatpush.msra.mxu0 0.0
          %302 = vmatpush.msra.mxu0 0.0
          %303 = vmatpush.msra.mxu0 0.0
          %304 = vmatpush.msra.mxu0 0.0
          %305 = vmatpush.msra.mxu0 0.0
          %306 = vmatpush.msra.mxu0 0.0
          %307 = vmatpush.msra.mxu0 0.0
          %308 = vmatpush.msra.mxu0 0.0
          %309 = vmatpush.msra.mxu0 0.0
          %310 = vmatpush.msra.mxu0 0.0
          %311 = vmatpush.msra.mxu0 0.0
          %312 = vmatpush.msra.mxu0 0.0
          %313 = vmatpush.msra.mxu0 0.0
          %314 = vmatpush.msra.mxu0 0.0
          %315 = vmatpush.msra.mxu0 %v299
          %316 = vmatpush.msra.mxu0 %v232
          %317 = vmatmul.f32.gmra.mxu0 %v296
          %v318 = vpop.f32.mrf.mxu0
          %v319 = vadd.f32 0.0, %v318
          %320 = vdwg.mxu0
          %v322 = vsel %vm294, %v266, 0
          %324 = vmatpush.msra.mxu0 0.0
          %325 = vmatpush.msra.mxu0 0.0
          %326 = vmatpush.msra.mxu0 0.0
          %327 = vmatpush.msra.mxu0 0.0
          %328 = vmatpush.msra.mxu0 0.0
          %329 = vmatpush.msra.mxu0 0.0
          %330 = vmatpush.msra.mxu0 0.0
          %331 = vmatpush.msra.mxu0 0.0
          %332 = vmatpush.msra.mxu0 0.0
          %333 = vmatpush.msra.mxu0 0.0
          %334 = vmatpush.msra.mxu0 0.0
          %335 = vmatpush.msra.mxu0 0.0
          %336 = vmatpush.msra.mxu0 0.0
          %337 = vmatpush.msra.mxu0 0.0
          %338 = vmatpush.msra.mxu0 %v299
          %339 = vmatpush.msra.mxu0 %v232
          %340 = vmatmul.f32.gmra.mxu0 %v322
          %v341 = vpop.f32.mrf.mxu0
          %v342 = vadd.f32 %v319, %v341
          %343 = vdwg.mxu0
          %v344 = vxor.u32 %v342, 2147483648
          %v345 = vmul.f32 %v344, 1.442695
          %v346 = vpow.pop %v345
          %v347 = vadd.f32 %v346, 1.0
          %v348 = vrcp.pop %v347
          %v349 = vmul.f32 %v347, %v348
          %v350 = vsub.f32 1.0, %v349
          %v351 = vmul.f32 %v348, %v350
          %v352 = vadd.f32 %v348, %v351
          %vm353 = vweird.f32 %v347
          %vm354 = vweird.f32 %v348
          %vm355 = vmor %vm353, %vm354
          %v356 = vsel %vm355, %v348, %v352
          %v357 = vand.u32 2147483647, %v347
          %vm358 = vcmp.eq.f32.partialorder %v357, 8.507059e+37
          %v359 = vand.u32 %v347, 2147483648
          %v360 = vor.u32 1.1754944e-38, %v359
          %v361 = vsel %vm358, %v360, %v356
          %v362 = vmul.f32 1.0, %v361
          %vm363 = vcmask 24576
          %364 = vst.msk [vmem:[%s185] sm:$0x1] %vm363, %v362
        $region40: #{tpu_custom_call.1} parent=31 // pred_fallthru
          _
        %s365 = sand.u32 %s107, 1
        %s366 = scalar_lea.sflag [#allocation5], %s365
        %s367 = sand.u32 %s107, 1
        %s368 = scalar_lea.vmem [#allocation4], %s367
        // Predicated region
        $region41: #{tpu_custom_call.1} parent=31 // pred_check
          %p369 = pneg %p117
        $region42: #{tpu_custom_call.1} parent=31 // pred_check_branch
          %371 = sbr.rel (%p369) target = $region44
        $region43: #{tpu_custom_call.1} parent=31 // pred_region
          %373 = vsyncadd %s366, 0
          %s374 = scalar_lea.hbm %s3, %s21
          %s376 = sshll.u32 %s368, 4
          %s377 = int_to_ptr.vmem [resolvable:$true] %s376
          %s378 = sshll.u32 %s374, 4
          %s379 = int_to_ptr.hbm [resolvable:$true] %s378
          %381 = dma.vmem_to_hbm [thread:$0]  %s377, 16, %s379, %s366
        $region44: #{tpu_custom_call.1} parent=31 // pred_fallthru
          _
      $region32: #{tpu_custom_call.1} parent=5 // pred_fallthru
        _
      %p382 = scmp.le.s32.totalorder 2, %s12
      // Predicated region
      $region45: #{tpu_custom_call.1} parent=5 // pred_check
        %p383 = pneg %p382
      $region46: #{tpu_custom_call.1} parent=5 // pred_check_branch
        %385 = sbr.rel (%p383) target = $region48
      $region47: #{tpu_custom_call.1} parent=5 // pred_region
        %s386 = ssub.s32 %s12, 2
        // Predicated region
        $region49: #{tpu_custom_call.1} parent=47 // pred_check
          %p387 = pneg %p123
        $region50: #{tpu_custom_call.1} parent=47 // pred_check_branch
          %389 = sbr.rel (%p387) target = $region52
        $region51: #{tpu_custom_call.1} parent=47 // pred_region
          %s390 = sand.u32 %s108, 1
          %s391 = scalar_lea.sflag [#allocation5], %s390
          %s392 = sand.u32 %s108, 1
          %s393 = scalar_lea.vmem [#allocation4], %s392
          %395 = dma.done %s391, 16
        $region52: #{tpu_custom_call.1} parent=47 // pred_fallthru
          _
      $region48: #{tpu_custom_call.1} parent=5 // pred_fallthru
        _
    $region6: #{tpu_custom_call.1} parent=1 // loop_footer
      %s16 = sadd.s32 1, %s12
    $region7: #{tpu_custom_call.1} parent=1 // loop_footer_branch
      %11 = sbr.rel target = $region3
    $region8: #{tpu_custom_call.1} parent=1 // loop_exit
      _
    %396 = vsyncpa [#allocation5], 1
    %s397 = scalar_lea.sflag [#allocation5], 1
    %398 = vsyncpa %s397, 1

</llo_original>
